<compile_context>
chip_gen: v5e
topology: v5e:2x2
jax: 0.10.0
libtpu: 0.0.40
codegen_flags: <defaults>
</compile_context>

<pallas_src>
import math
import functools

import jax
import jax.numpy as jnp
from jax import lax
from jax.experimental import pallas as pl
from jax.experimental.pallas import tpu as pltpu


# --------------------------- GroupNorm stats kernel -------------------------

def _gn_stats_kernel(x_ref, gamma_ref, beta_ref, gmat_ref, gmatt_ref,
                     scale_ref, shift_ref, csum_sc, csq_sc,
                     *, n_per_group, eps):
    """Per-batch GroupNorm stats -> folded per-channel scale/shift."""
    s = pl.program_id(1)

    @pl.when(s == 0)
    def _():
        csum_sc[...] = jnp.zeros(csum_sc.shape, csum_sc.dtype)
        csq_sc[...] = jnp.zeros(csq_sc.shape, csq_sc.dtype)

    x = x_ref[0].astype(jnp.float32)                       # (ts, C)
    csum_sc[...] += jnp.sum(x, axis=0, keepdims=True)      # (1, C)
    csq_sc[...] += jnp.sum(x * x, axis=0, keepdims=True)   # (1, C)

    @pl.when(s == pl.num_programs(1) - 1)
    def _():
        gmat = gmat_ref[...]                               # (C, G) one-hot membership
        gmatt = gmatt_ref[...]                             # (G, C) prefolded transpose
        inv_n = 1.0 / float(n_per_group)
        gsum = jnp.dot(csum_sc[...], gmat, preferred_element_type=jnp.float32)
        gsq = jnp.dot(csq_sc[...], gmat, preferred_element_type=jnp.float32)
        mean_g = gsum * inv_n
        var_g = jnp.maximum(gsq * inv_n - mean_g * mean_g, 0.0)
        mean_c = jnp.dot(mean_g, gmatt, preferred_element_type=jnp.float32)
        var_c = jnp.dot(var_g, gmatt, preferred_element_type=jnp.float32)
        scale = lax.rsqrt(var_c + eps) * gamma_ref[...]    # rstd * gamma
        scale_ref[0] = scale
        shift_ref[0] = beta_ref[...] - mean_c * scale      # beta - mean*scale


# --------------------------- K/V projection kernel --------------------------

def _kv_proj_kernel(x_ref, scale_ref, shift_ref, wkv_ref, bkv_ref, k_ref, v_ref):
    """Normalize + fused K/V projection, written once per spatial tile (bf16)."""
    c = k_ref.shape[-1]
    xn = x_ref[0].astype(jnp.float32) * scale_ref[0] + shift_ref[0]
    kvp = jnp.dot(xn.astype(jnp.bfloat16), wkv_ref[...],
                  preferred_element_type=jnp.float32) + bkv_ref[...]   # (tk, 2C)
    k_ref[0] = kvp[:, :c].astype(jnp.bfloat16)
    v_ref[0] = kvp[:, c:].astype(jnp.bfloat16)


# --------------------- flash attention + out-proj + residual ----------------

def _flash_attn_kernel(x_q_ref, k_ref, v_ref, scale_ref, shift_ref,
                       wq_ref, bq_ref, wout_ref, bout_ref,
                       o_ref, q_sc, m_sc, l_sc, acc_sc):
    kv = pl.program_id(2)

    @pl.when(kv == 0)
    def _():
        # Normalize + Q projection once per q tile (Hadamard + C^-0.5 folded
        # into wq/bq at pack time); kept resident across the KV loop.
        xq = x_q_ref[0].astype(jnp.float32) * scale_ref[0] + shift_ref[0]
        q = jnp.dot(xq.astype(jnp.bfloat16), wq_ref[...],
                    preferred_element_type=jnp.float32) + bq_ref[...]
        q_sc[...] = q.astype(jnp.bfloat16)
        m_sc[...] = jnp.full(m_sc.shape, -jnp.inf, m_sc.dtype)
        l_sc[...] = jnp.zeros(l_sc.shape, l_sc.dtype)
        acc_sc[...] = jnp.zeros(acc_sc.shape, acc_sc.dtype)

    k = k_ref[0]                                           # (tk, C) bf16
    v = v_ref[0]                                           # (tk, C) bf16

    # Online-softmax update; scores never fully materialized in HBM.
    s = lax.dot_general(q_sc[...], k, (((1,), (1,)), ((), ())),
                        preferred_element_type=jnp.float32)        # (tq, tk)
    m_prev = m_sc[...]
    m_new = jnp.maximum(m_prev, jnp.max(s, axis=-1, keepdims=True))
    alpha = jnp.exp(m_prev - m_new)
    # bf16 exponentials relieve the single EUP slot on v6e/v7x; on v5e the
    # compiler upcasts (no bf16 EUP) with identical semantics.
    p = jnp.exp((s - m_new).astype(jnp.bfloat16))                  # (tq, tk) bf16
    l_sc[...] = alpha * l_sc[...] + jnp.sum(p.astype(jnp.float32),
                                            axis=-1, keepdims=True)
    acc_sc[...] = alpha * acc_sc[...] + jnp.dot(p, v,
                                                preferred_element_type=jnp.float32)
    m_sc[...] = m_new

    @pl.when(kv == pl.num_programs(2) - 1)
    def _():
        out = acc_sc[...] * pl.reciprocal(l_sc[...], approx=True)  # (tq, C)
        out = jnp.dot(out.astype(jnp.bfloat16), wout_ref[...],
                      preferred_element_type=jnp.float32) + bout_ref[...]
        o_ref[0] = (out + x_q_ref[0].astype(jnp.float32)).astype(o_ref.dtype)


# ------------------------------ parameter glue -------------------------------

def _ternary_quantize(w):
    """ScaledWeightTernary.forward: alpha * sign-with-deadzone(w)."""
    alpha = jnp.mean(jnp.abs(w))
    thr = 0.001 * alpha
    return alpha * jnp.where(w > thr, 1.0, jnp.where(w < -thr, -1.0, 0.0))


def _hadamard_matrix(n):
    h = jnp.array([[1.0]], dtype=jnp.float32)
    while h.shape[0] < n:
        h = jnp.concatenate([jnp.concatenate([h, h], axis=1),
                             jnp.concatenate([h, -h], axis=1)], axis=0)
    return h


def make_module_params(key, c):
    """Synthetic params mirroring AttentionBlock.__init__ (conv-layout weights)."""
    k1, k2, k3, k4, k5, k6 = jax.random.split(key, 6)
    gamma = (1.0 + 0.1 * jax.random.normal(k1, (c,))).astype(jnp.float32)
    beta = (0.1 * jax.random.normal(k2, (c,))).astype(jnp.float32)
    # to_qkv: Conv2d(c, 3c, 1); ternarize the whole weight tensor (layer-wise alpha).
    wqkv = _ternary_quantize(0.2 * jax.random.normal(k3, (3 * c, c), dtype=jnp.float32))
    bqkv = 0.1 * jax.random.normal(k4, (3 * c,), dtype=jnp.float32)
    # to_out: Conv2d(c, c, 1)
    wout = _ternary_quantize(0.2 * jax.random.normal(k5, (c, c), dtype=jnp.float32))
    bout = 0.1 * jax.random.normal(k6, (c,), dtype=jnp.float32)
    return (gamma, beta, wqkv, bqkv, wout, bout)


def pack_params(mod_params, num_groups):
    """Fold Hadamard + softmax scale into the projections, fuse K/V, cast bf16."""
    gamma, beta, wqkv, bqkv, wout, bout = mod_params
    c = gamma.shape[0]
    assert c > 0 and (c & (c - 1)) == 0, "power-of-two channels required"
    assert c % num_groups == 0

    hmat = _hadamard_matrix(c) / math.sqrt(c)
    scale = float(c) ** -0.5

    wq, wk, wv = wqkv[:c].T, wqkv[c:2 * c].T, wqkv[2 * c:].T        # (C_in, C_out)
    bq, bk, bv = bqkv[:c][None, :], bqkv[c:2 * c][None, :], bqkv[2 * c:][None, :]

    wq_f = (wq @ hmat) * scale                # Hadamard + C^-0.5 folded into Q
    bq_f = (bq @ hmat) * scale
    wkv_f = jnp.concatenate([wk @ hmat, wv @ hmat], axis=1)         # (C, 2C)
    bkv_f = jnp.concatenate([bk @ hmat, bv @ hmat], axis=1)         # (1, 2C)

    gmat = (jnp.arange(c)[:, None] // (c // num_groups)
            == jnp.arange(num_groups)[None, :]).astype(jnp.float32)

    return dict(
        gamma=gamma[None, :].astype(jnp.float32),
        beta=beta[None, :].astype(jnp.float32),
        gmat=gmat, gmatt=gmat.T,
        wq=wq_f.astype(jnp.bfloat16), bq=bq_f.astype(jnp.float32),
        wkv=wkv_f.astype(jnp.bfloat16), bkv=bkv_f.astype(jnp.float32),
        wout=wout.T.astype(jnp.bfloat16), bout=bout[None, :].astype(jnp.float32),
    )


# --------------------------------- wrapper -----------------------------------

def _vmem_capacity_bytes():
    try:
        return int(pltpu.get_tpu_info().vmem_capacity_bytes)
    except Exception:
        return 64 * 2 ** 20          # conservative default (v7x per-TC VMEM)


def _default_tile(hw, batch, phys_vmem):
    # 128-MiB parts (v5e/v6e): go bigger to shrink nq (less K/V re-streaming);
    # 64-MiB parts (v7x): keep <=512 so double buffering survives.
    cap = 1024 if phys_vmem >= 100 * 2 ** 20 else 512
    t = min(hw, cap)
    while hw % t:
        t //= 2
    # keep both v7x TensorCores busy: want batch * (hw // t) >= 2
    if batch * (hw // t) < 2 and t % 16 == 0 and hw % (t // 2) == 0:
        t //= 2
    return t


def attention_block(x_nchw, packed, num_groups, *, q_block=None, kv_block=None,
                    eps=1e-5):
    b, c, h, w = x_nchw.shape
    hw = h * w
    # Single NHWC bf16 materialization of x (cast fused into the transpose).
    x = jnp.transpose(x_nchw, (0, 2, 3, 1)).reshape(b, hw, c).astype(jnp.bfloat16)

    phys_vmem = _vmem_capacity_bytes()
    tq = q_block if q_block is not None else _default_tile(hw, b, phys_vmem)
    tk = kv_block if kv_block is not None else _default_tile(hw, b, phys_vmem)
    assert hw % tq == 0 and hw % tk == 0, "tile sizes must divide H*W"
    assert (tq % 8 == 0 or tq == hw) and (tk % 8 == 0 or tk == hw)
    nq, nkv = hw // tq, hw // tk

    # ---- pass 1: GroupNorm stats -> folded per-channel scale/shift ---------
    stats_kernel = functools.partial(_gn_stats_kernel,
                                     n_per_group=hw * (c // num_groups), eps=eps)
    scale_c, shift_c = pl.pallas_call(
        stats_kernel,
        out_shape=(jax.ShapeDtypeStruct((b, 1, c), jnp.float32),
                   jax.ShapeDtypeStruct((b, 1, c), jnp.float32)),
        grid=(b, nkv),
        in_specs=[pl.BlockSpec((1, tk, c), lambda i, s: (i, s, 0)),
                  pl.BlockSpec((1, c), lambda i, s: (0, 0)),
                  pl.BlockSpec((1, c), lambda i, s: (0, 0)),
                  pl.BlockSpec(packed['gmat'].shape, lambda i, s: (0, 0)),
                  pl.BlockSpec(packed['gmatt'].shape, lambda i, s: (0, 0))],
        out_specs=(pl.BlockSpec((1, 1, c), lambda i, s: (i, 0, 0)),
                   pl.BlockSpec((1, 1, c), lambda i, s: (i, 0, 0))),
        scratch_shapes=[pltpu.VMEM((1, c), jnp.float32),
                        pltpu.VMEM((1, c), jnp.float32)],
        compiler_params=pltpu.CompilerParams(
            dimension_semantics=("parallel", "arbitrary")),
    )(x, packed['gamma'], packed['beta'], packed['gmat'], packed['gmatt'])

    # ---- pass 2: K/V projection (computed ONCE, not per q tile) ------------
    k_proj, v_proj = pl.pallas_call(
        _kv_proj_kernel,
        out_shape=(jax.ShapeDtypeStruct((b, hw, c), jnp.bfloat16),
                   jax.ShapeDtypeStruct((b, hw, c), jnp.bfloat16)),
        grid=(b, nkv),
        in_specs=[pl.BlockSpec((1, tk, c), lambda i, s: (i, s, 0)),
                  pl.BlockSpec((1, 1, c), lambda i, s: (i, 0, 0)),
                  pl.BlockSpec((1, 1, c), lambda i, s: (i, 0, 0)),
                  pl.BlockSpec(packed['wkv'].shape, lambda i, s: (0, 0)),
                  pl.BlockSpec(packed['bkv'].shape, lambda i, s: (0, 0))],
        out_specs=(pl.BlockSpec((1, tk, c), lambda i, s: (i, s, 0)),
                   pl.BlockSpec((1, tk, c), lambda i, s: (i, s, 0))),
        compiler_params=pltpu.CompilerParams(
            dimension_semantics=("parallel", "parallel")),
    )(x, scale_c, shift_c, packed['wkv'], packed['bkv'])

    # ---- pass 3: Q proj + flash attention + out proj + residual ------------
    weight_args = (packed['wq'], packed['bq'], packed['wout'], packed['bout'])

    def full_spec(p):
        return pl.BlockSpec(p.shape, lambda b_, qi, kv: (0,) * p.ndim)

    # Working-set estimate (no 4x fudge): streamed tiles double-buffered,
    # weights double-buffered (default), scratch, and s/p/xn temporaries.
    wbytes = sum(int(p.size) * p.dtype.itemsize for p in weight_args)
    est = (2 * tq * c * 2                              # x_q bf16 (2 bufs)
           + 2 * 2 * tk * c * 2                        # k + v bf16 (2 bufs each)
           + 2 * tq * c * 4                            # out f32 (2 bufs)
           + 2 * 2 * 2 * c * 4                         # scale/shift (2 bufs each)
           + 2 * wbytes                                # wq/bq/wout/bout (2 bufs)
           + (tq * c * 2 + 2 * tq * 4 + tq * c * 4)    # q/m/l/acc scratch
           + tq * tk * 4 + tq * tk * 2                 # s (f32) + p (bf16)
           + 2 * tq * c * 4)                           # xn_q / out temporaries
    vmem_limit = int(min(phys_vmem - 16 * 2 ** 20,     # headroom for internal scratch
                         max(16 * 2 ** 20, 2 * est)))

    out = pl.pallas_call(
        _flash_attn_kernel,
        out_shape=jax.ShapeDtypeStruct((b, hw, c), jnp.float32),
        grid=(b, nq, nkv),
        in_specs=[pl.BlockSpec((1, tq, c), lambda b_, qi, kv: (b_, qi, 0)),
                  pl.BlockSpec((1, tk, c), lambda b_, qi, kv: (b_, kv, 0)),
                  pl.BlockSpec((1, tk, c), lambda b_, qi, kv: (b_, kv, 0)),
                  pl.BlockSpec((1, 1, c), lambda b_, qi, kv: (b_, 0, 0)),
                  pl.BlockSpec((1, 1, c), lambda b_, qi, kv: (b_, 0, 0)),
                  full_spec(packed['wq']), full_spec(packed['bq']),
                  full_spec(packed['wout']), full_spec(packed['bout'])],
        out_specs=pl.BlockSpec((1, tq, c), lambda b_, qi, kv: (b_, qi, 0)),
        scratch_shapes=[pltpu.VMEM((tq, c), jnp.bfloat16),   # projected Q tile
                        pltpu.VMEM((tq, 1), jnp.float32),    # running max m
                        pltpu.VMEM((tq, 1), jnp.float32),    # running sum l
                        pltpu.VMEM((tq, c), jnp.float32)],   # output accumulator
        compiler_params=pltpu.CompilerParams(
            dimension_semantics=("parallel", "parallel", "arbitrary"),
            vmem_limit_bytes=vmem_limit),
    )(x, k_proj, v_proj, scale_c, shift_c, *weight_args)

    return jnp.transpose(out.reshape(b, h, w, c), (0, 3, 1, 2))


# ---------------------------- pure-JAX reference -----------------------------

def attention_block_ref(x_nchw, mod_params, num_groups, eps=1e-5):
    """Exact f32 module math (no weight folding) for correctness checks."""
    gamma, beta, wqkv, bqkv, wout, bout = mod_params
    b, c, h, w = x_nchw.shape
    hw = h * w
    x = jnp.transpose(x_nchw, (0, 2, 3, 1)).reshape(b, hw, c).astype(jnp.float32)
    xg = x.reshape(b, hw, num_groups, c // num_groups)
    mean = xg.mean(axis=(1, 3), keepdims=True)
    var = ((xg - mean) ** 2).mean(axis=(1, 3), keepdims=True)
    xn = ((xg - mean) / jnp.sqrt(var + eps)).reshape(b, hw, c)
    xn = xn * gamma + beta
    qkv = xn @ wqkv.T + bqkv
    q, k, v = qkv[..., :c], qkv[..., c:2 * c], qkv[..., 2 * c:]
    hmat = _hadamard_matrix(c) / math.sqrt(c)
    q, k, v = q @ hmat, k @ hmat, v @ hmat
    s = jnp.einsum('bnc,bmc->bnm', q, k) * (float(c) ** -0.5)
    p = jax.nn.softmax(s, axis=-1)
    out = jnp.einsum('bnm,bmc->bnc', p, v)
    out = out @ wout.T + bout + x
    return jnp.transpose(out.reshape(b, h, w, c), (0, 3, 1, 2))


if __name__ == "__main__":
    key = jax.random.PRNGKey(0)
    kx, kp = jax.random.split(key)

    B, C, H, W = 2, 8, 8, 8     # AttentionBlock(8, norm='gn', num_groups=4)
    NUM_GROUPS = 4

    x = jax.random.normal(kx, (B, C, H, W), dtype=jnp.float32)
    mod_params = make_module_params(kp, C)
    packed = pack_params(mod_params, NUM_GROUPS)

    # 32-wide Q/KV tiles so the flash (online-softmax) path is exercised with
    # a non-trivial (B, nQ, nKV) = (2, 2, 2) grid.
    y = attention_block(x, packed, NUM_GROUPS, q_block=32, kv_block=32)
    y = jax.block_until_ready(y)

    y_ref = attention_block_ref(x, mod_params, NUM_GROUPS)
    assert y.shape == (B, C, H, W)
    max_err = jnp.max(jnp.abs(y - y_ref))
    # bf16 activation streaming + bf16 MXU matmuls + bf16 softmax exp +
    # approx reciprocal vs the exact f32 reference => loosened tolerance.
    assert jnp.allclose(y, y_ref, rtol=3e-2, atol=3e-2), float(max_err)
    print("KERNEL_OK")
</pallas_src>

<mosaic_0001>
module attributes {stable_mosaic.version = 11 : i64} {
  func.func @_gn_stats_kernel(%arg0: i32, %arg1: i32, %arg2: memref<1x32x8xbf16, #tpu.memory_space<vmem>>, %arg3: memref<1x8xf32, #tpu.memory_space<vmem>>, %arg4: memref<1x8xf32, #tpu.memory_space<vmem>>, %arg5: memref<8x4xf32, #tpu.memory_space<vmem>>, %arg6: memref<4x8xf32, #tpu.memory_space<vmem>>, %arg7: memref<1x1x8xf32, #tpu.memory_space<vmem>>, %arg8: memref<1x1x8xf32, #tpu.memory_space<vmem>>, %arg9: memref<1x8xf32, #tpu.memory_space<vmem>>, %arg10: memref<1x8xf32, #tpu.memory_space<vmem>>) attributes {dimension_semantics = [#tpu.dimension_semantics<parallel>, #tpu.dimension_semantics<arbitrary>], iteration_bounds = array<i64: 2, 2>, scalar_prefetch = 0 : i64, scratch_operands = 2 : i64, tpu.core_type = #tpu.core_type<tc>, window_params = [{transform_indices = @transform_0, window_bounds = array<i64: 1, 32, 8>}, {pipeline_mode = #tpu.pipeline_mode<synchronous>, transform_indices = @transform_1, window_bounds = array<i64: 1, 8>}, {pipeline_mode = #tpu.pipeline_mode<synchronous>, transform_indices = @transform_2, window_bounds = array<i64: 1, 8>}, {pipeline_mode = #tpu.pipeline_mode<synchronous>, transform_indices = @transform_3, window_bounds = array<i64: 8, 4>}, {pipeline_mode = #tpu.pipeline_mode<synchronous>, transform_indices = @transform_4, window_bounds = array<i64: 4, 8>}, {transform_indices = @transform_5, window_bounds = array<i64: 1, 1, 8>}, {transform_indices = @transform_6, window_bounds = array<i64: 1, 1, 8>}]} {
    %c0_i32 = arith.constant 0 : i32
    %0 = arith.cmpi eq, %arg1, %c0_i32 : i32
    %1 = arith.extui %0 : i1 to i32
    %c0_i32_0 = arith.constant 0 : i32
    %2 = arith.cmpi ne, %1, %c0_i32_0 : i32
    scf.if %2 {
      %cst_13 = arith.constant 0.000000e+00 : f32
      %20 = vector.broadcast %cst_13 : f32 to vector<1x8xf32>
      %c0_14 = arith.constant 0 : index
      %c0_15 = arith.constant 0 : index
      %21 = vector.load %arg9[%c0_14, %c0_15] : memref<1x8xf32, #tpu.memory_space<vmem>>, vector<1x8xf32>
      tpu.vector_store %arg9[%c0_14, %c0_15], %20 {strides = array<i32>} : memref<1x8xf32, #tpu.memory_space<vmem>>, vector<1x8xf32>,
      %cst_16 = arith.constant 0.000000e+00 : f32
      %22 = vector.broadcast %cst_16 : f32 to vector<1x8xf32>
      %c0_17 = arith.constant 0 : index
      %c0_18 = arith.constant 0 : index
      %23 = vector.load %arg10[%c0_17, %c0_18] : memref<1x8xf32, #tpu.memory_space<vmem>>, vector<1x8xf32>
      tpu.vector_store %arg10[%c0_17, %c0_18], %22 {strides = array<i32>} : memref<1x8xf32, #tpu.memory_space<vmem>>, vector<1x8xf32>,
    } else {
    }
    %c0 = arith.constant 0 : index
    %c0_1 = arith.constant 0 : index
    %c0_2 = arith.constant 0 : index
    %3 = vector.load %arg2[%c0, %c0_1, %c0_2] : memref<1x32x8xbf16, #tpu.memory_space<vmem>>, vector<1x32x8xbf16>
    %4 = vector.shape_cast %3 : vector<1x32x8xbf16> to vector<32x8xbf16>
    %5 = arith.extf %4 : vector<32x8xbf16> to vector<32x8xf32>
    %c0_3 = arith.constant 0 : index
    %c0_4 = arith.constant 0 : index
    %6 = vector.load %arg9[%c0_3, %c0_4] : memref<1x8xf32, #tpu.memory_space<vmem>>, vector<1x8xf32>
    %cst = arith.constant dense<0.000000e+00> : vector<8xf32>
    %7 = vector.multi_reduction <add>, %5, %cst [0] : vector<32x8xf32> to vector<8xf32>
    %8 = vector.shape_cast %7 : vector<8xf32> to vector<1x8xf32>
    %9 = arith.addf %6, %8 : vector<1x8xf32>
    %c0_5 = arith.constant 0 : index
    %c0_6 = arith.constant 0 : index
    %10 = vector.load %arg9[%c0_5, %c0_6] : memref<1x8xf32, #tpu.memory_space<vmem>>, vector<1x8xf32>
    tpu.vector_store %arg9[%c0_5, %c0_6], %9 {strides = array<i32>} : memref<1x8xf32, #tpu.memory_space<vmem>>, vector<1x8xf32>,
    %c0_7 = arith.constant 0 : index
    %c0_8 = arith.constant 0 : index
    %11 = vector.load %arg10[%c0_7, %c0_8] : memref<1x8xf32, #tpu.memory_space<vmem>>, vector<1x8xf32>
    %12 = arith.mulf %5, %5 : vector<32x8xf32>
    %cst_9 = arith.constant dense<0.000000e+00> : vector<8xf32>
    %13 = vector.multi_reduction <add>, %12, %cst_9 [0] : vector<32x8xf32> to vector<8xf32>
    %14 = vector.shape_cast %13 : vector<8xf32> to vector<1x8xf32>
    %15 = arith.addf %11, %14 : vector<1x8xf32>
    %c0_10 = arith.constant 0 : index
    %c0_11 = arith.constant 0 : index
    %16 = vector.load %arg10[%c0_10, %c0_11] : memref<1x8xf32, #tpu.memory_space<vmem>>, vector<1x8xf32>
    tpu.vector_store %arg10[%c0_10, %c0_11], %15 {strides = array<i32>} : memref<1x8xf32, #tpu.memory_space<vmem>>, vector<1x8xf32>,
    %c1_i32 = arith.constant 1 : i32
    %17 = arith.cmpi eq, %arg1, %c1_i32 : i32
    %18 = arith.extui %17 : i1 to i32
    %c0_i32_12 = arith.constant 0 : i32
    %19 = arith.cmpi ne, %18, %c0_i32_12 : i32
    scf.if %19 {
      %c0_13 = arith.constant 0 : index
      %c0_14 = arith.constant 0 : index
      %20 = vector.load %arg5[%c0_13, %c0_14] : memref<8x4xf32, #tpu.memory_space<vmem>>, vector<8x4xf32>
      %c0_15 = arith.constant 0 : index
      %c0_16 = arith.constant 0 : index
      %21 = vector.load %arg6[%c0_15, %c0_16] : memref<4x8xf32, #tpu.memory_space<vmem>>, vector<4x8xf32>
      %c0_17 = arith.constant 0 : index
      %c0_18 = arith.constant 0 : index
      %22 = vector.load %arg9[%c0_17, %c0_18] : memref<1x8xf32, #tpu.memory_space<vmem>>, vector<1x8xf32>
      %cst_19 = arith.constant dense<0.000000e+00> : vector<1x4xf32>
      %23 = tpu.matmul %22, %20, %cst_19 {dimension_numbers = #tpu.dot_dimension_numbers<[1], [0], [0], [1], [0, 0, 1, 1], [], []>} : vector<1x8xf32>, vector<8x4xf32>, vector<1x4xf32> -> vector<1x4xf32>
      %c0_20 = arith.constant 0 : index
      %c0_21 = arith.constant 0 : index
      %24 = vector.load %arg10[%c0_20, %c0_21] : memref<1x8xf32, #tpu.memory_space<vmem>>, vector<1x8xf32>
      %cst_22 = arith.constant dense<0.000000e+00> : vector<1x4xf32>
      %25 = tpu.matmul %24, %20, %cst_22 {dimension_numbers = #tpu.dot_dimension_numbers<[1], [0], [0], [1], [0, 0, 1, 1], [], []>} : vector<1x8xf32>, vector<8x4xf32>, vector<1x4xf32> -> vector<1x4xf32>
      %cst_23 = arith.constant 7.812500e-03 : f32
      %26 = vector.broadcast %cst_23 : f32 to vector<1x4xf32>
      %27 = arith.mulf %23, %26 : vector<1x4xf32>
      %cst_24 = arith.constant 7.812500e-03 : f32
      %28 = vector.broadcast %cst_24 : f32 to vector<1x4xf32>
      %29 = arith.mulf %25, %28 : vector<1x4xf32>
      %30 = arith.mulf %27, %27 : vector<1x4xf32>
      %31 = arith.subf %29, %30 : vector<1x4xf32>
      %cst_25 = arith.constant 0.000000e+00 : f32
      %32 = vector.broadcast %cst_25 : f32 to vector<1x4xf32>
      %33 = arith.maximumf %31, %32 : vector<1x4xf32>
      %cst_26 = arith.constant dense<0.000000e+00> : vector<1x8xf32>
      %34 = tpu.matmul %27, %21, %cst_26 {dimension_numbers = #tpu.dot_dimension_numbers<[1], [0], [0], [1], [0, 0, 1, 1], [], []>} : vector<1x4xf32>, vector<4x8xf32>, vector<1x8xf32> -> vector<1x8xf32>
      %cst_27 = arith.constant dense<0.000000e+00> : vector<1x8xf32>
      %35 = tpu.matmul %33, %21, %cst_27 {dimension_numbers = #tpu.dot_dimension_numbers<[1], [0], [0], [1], [0, 0, 1, 1], [], []>} : vector<1x4xf32>, vector<4x8xf32>, vector<1x8xf32> -> vector<1x8xf32>
      %cst_28 = arith.constant 9.99999974E-6 : f32
      %36 = vector.broadcast %cst_28 : f32 to vector<1x8xf32>
      %37 = arith.addf %35, %36 : vector<1x8xf32>
      %38 = math.rsqrt %37 : vector<1x8xf32>
      %c0_29 = arith.constant 0 : index
      %c0_30 = arith.constant 0 : index
      %39 = vector.load %arg3[%c0_29, %c0_30] : memref<1x8xf32, #tpu.memory_space<vmem>>, vector<1x8xf32>
      %40 = arith.mulf %38, %39 : vector<1x8xf32>
      %c0_31 = arith.constant 0 : index
      %c0_32 = arith.constant 0 : index
      %c0_33 = arith.constant 0 : index
      %41 = vector.load %arg7[%c0_31, %c0_32, %c0_33] : memref<1x1x8xf32, #tpu.memory_space<vmem>>, vector<1x1x8xf32>
      %42 = vector.shape_cast %41 : vector<1x1x8xf32> to vector<1x8xf32>
      %43 = vector.shape_cast %40 : vector<1x8xf32> to vector<1x1x8xf32>
      tpu.vector_store %arg7[%c0_31, %c0_32, %c0_33], %43 {strides = array<i32>} : memref<1x1x8xf32, #tpu.memory_space<vmem>>, vector<1x1x8xf32>,
      %c0_34 = arith.constant 0 : index
      %c0_35 = arith.constant 0 : index
      %44 = vector.load %arg4[%c0_34, %c0_35] : memref<1x8xf32, #tpu.memory_space<vmem>>, vector<1x8xf32>
      %45 = arith.mulf %34, %40 : vector<1x8xf32>
      %46 = arith.subf %44, %45 : vector<1x8xf32>
      %c0_36 = arith.constant 0 : index
      %c0_37 = arith.constant 0 : index
      %c0_38 = arith.constant 0 : index
      %47 = vector.load %arg8[%c0_36, %c0_37, %c0_38] : memref<1x1x8xf32, #tpu.memory_space<vmem>>, vector<1x1x8xf32>
      %48 = vector.shape_cast %47 : vector<1x1x8xf32> to vector<1x8xf32>
      %49 = vector.shape_cast %46 : vector<1x8xf32> to vector<1x1x8xf32>
      tpu.vector_store %arg8[%c0_36, %c0_37, %c0_38], %49 {strides = array<i32>} : memref<1x1x8xf32, #tpu.memory_space<vmem>>, vector<1x1x8xf32>,
    } else {
    }
    return
  }
  func.func @transform_0(%arg0: i32, %arg1: i32) -> (i32, i32, i32) {
    %c0_i32 = arith.constant 0 : i32
    %c0_i32_0 = arith.constant 0 : i32
    return %arg0, %arg1, %c0_i32 : i32, i32, i32
  }
  func.func @transform_1(%arg0: i32, %arg1: i32) -> (i32, i32) {
    %c0_i32 = arith.constant 0 : i32
    %c0_i32_0 = arith.constant 0 : i32
    %c0_i32_1 = arith.constant 0 : i32
    return %c0_i32, %c0_i32_0 : i32, i32
  }
  func.func @transform_2(%arg0: i32, %arg1: i32) -> (i32, i32) {
    %c0_i32 = arith.constant 0 : i32
    %c0_i32_0 = arith.constant 0 : i32
    %c0_i32_1 = arith.constant 0 : i32
    return %c0_i32, %c0_i32_0 : i32, i32
  }
  func.func @transform_3(%arg0: i32, %arg1: i32) -> (i32, i32) {
    %c0_i32 = arith.constant 0 : i32
    %c0_i32_0 = arith.constant 0 : i32
    %c0_i32_1 = arith.constant 0 : i32
    return %c0_i32, %c0_i32_0 : i32, i32
  }
  func.func @transform_4(%arg0: i32, %arg1: i32) -> (i32, i32) {
    %c0_i32 = arith.constant 0 : i32
    %c0_i32_0 = arith.constant 0 : i32
    %c0_i32_1 = arith.constant 0 : i32
    return %c0_i32, %c0_i32_0 : i32, i32
  }
  func.func @transform_5(%arg0: i32, %arg1: i32) -> (i32, i32, i32) {
    %c0_i32 = arith.constant 0 : i32
    %c0_i32_0 = arith.constant 0 : i32
    %c0_i32_1 = arith.constant 0 : i32
    return %arg0, %c0_i32, %c0_i32_0 : i32, i32, i32
  }
  func.func @transform_6(%arg0: i32, %arg1: i32) -> (i32, i32, i32) {
    %c0_i32 = arith.constant 0 : i32
    %c0_i32_0 = arith.constant 0 : i32
    %c0_i32_1 = arith.constant 0 : i32
    return %arg0, %c0_i32, %c0_i32_0 : i32, i32, i32
  }
}

</mosaic_0001>

<llo_original>
// kernel: tpu_custom_call.1
$region0: #{tpu_custom_call.1}
  #allocation0 [shape = 'u32[]', space=smem, size = 0x4, offset = 0x4, fixed_abs, tag = 'smem constant byte address 0x4 - core index']
  #allocation1 [shape = 'u32[72,128]{1,0:T(1,128)}', space=vmem, size = 0x9000, scoped, tag = 'internal scratch']
  #allocation2 [shape = 'f32[1,8]{1,0:T(1,128)}', space=vmem, size = 0x200, scoped, tag = 'scratch operand']
  #allocation3 [shape = 'f32[1,8]{1,0:T(1,128)}', space=vmem, size = 0x200, scoped, tag = 'scratch operand']
  %s0 = inlined_call_operand.vmem [shape: bf16[2,64,8], index: 0, kind: input, shape index: {}]
  %s1 = inlined_call_operand.vmem [shape: f32[1,8], index: 1, kind: input, shape index: {}]
  %s2 = inlined_call_operand.vmem [shape: f32[1,8], index: 2, kind: input, shape index: {}]
  %s3 = inlined_call_operand.vmem [shape: f32[8,4], index: 3, kind: input, shape index: {}]
  %s4 = inlined_call_operand.vmem [shape: f32[4,8], index: 4, kind: input, shape index: {}]
  %s5 = inlined_call_operand.hbm [shape: f32[2,1,8], index: 5, kind: output, shape index: {0}]
  %s6 = inlined_call_operand.hbm [shape: f32[2,1,8], index: 6, kind: output, shape index: {1}]
  %7 = xla_tuple %s5, %s6
  %s8 = sld [smem:[#allocation0]]
  $region69: #{tpu_custom_call.1} parent=0
    _
  %s10 = ssub.s32 1, %s8
  %s11 = scalar_select 0, %s10, %s8
  $region1: #{tpu_custom_call.1} parent=0
    #allocation4 [shape = 'u8[1024]{0}', space=vmem, size = 0x400, scoped, tag = 'output window, operand 0']
    #allocation5 [shape = 's32[2]{0}', space=sflag, size = 0x8, scoped, tag = 'scoped memory for tpu_custom_call.1']
    #allocation6 [shape = 'u8[1024]{0}', space=vmem, size = 0x400, scoped, tag = 'output window, operand 1']
    #allocation7 [shape = 's32[2]{0}', space=sflag, size = 0x8, scoped, tag = 'scoped memory for tpu_custom_call.1']
    %12 = vsyncpa [#allocation5], 0
    %s13 = scalar_lea.sflag [#allocation5], 1
    %14 = vsyncpa %s13, 0
    %15 = vsyncpa [#allocation7], 0
    %s16 = scalar_lea.sflag [#allocation7], 1
    %17 = vsyncpa %s16, 0
    loop: start=0, step=1, limit=6
    $region2: #{tpu_custom_call.1} parent=1 // loop_pre_header
      _
    $region3: #{tpu_custom_call.1} parent=1 // loop_header
      %s19 = sphi 0, %s23
      %p20 = scmp.ge.s32.totalorder %s19, 6
      %s26 = sphi 0, %s38
      %s27 = sphi 0, %s34
      %s28 = sphi 0, %s26
      %s29 = sphi 0, %s27
      %s30 = sphi 0, %s28
      %s31 = sphi 0, %s29
      %s43 = sphi 0, %s45
      %s46 = sphi 0, %s43
      %s47 = sphi 0, %s46
      %s63 = sphi 0, %s47
      %s67 = sphi 0, %s67
      %s69 = sphi 0, %s67
      %s70 = sphi 0, %s69
      %s84 = sphi 0, %s70
      %s88 = sphi 0, %s88
      %s90 = sphi 0, %s88
      %s91 = sphi 0, %s90
      %s105 = sphi 0, %s91
      %s109 = sphi 0, %s109
      %s111 = sphi 0, %s109
      %s112 = sphi 0, %s111
      %s126 = sphi 0, %s112
      %s130 = sphi 0, %s130
      %s132 = sphi 0, %s130
      %s133 = sphi 0, %s132
      %s147 = sphi 0, %s133
      %s153 = sphi 0, %s155
      %s156 = sphi 0, %s153
      %s157 = sphi 0, %s156
      %s173 = sphi 0, %s157
      %s179 = sphi 0, %s181
      %s182 = sphi 0, %s179
      %s183 = sphi 0, %s182
      %s199 = sphi 0, %s183
    $region4: #{tpu_custom_call.1} parent=1 // loop_header_branch
      %22 = sbr.rel (%p20) target = $region8
    $region5: #{tpu_custom_call.1} parent=1 // loop_body
      %s24 = ssub.s32 %s19, 1
      %s25 = ssub.s32 %s19, 2
      %s32 = sadd.s32 1, %s27
      %p33 = scmp.ge.s32.totalorder %s32, 2
      %s34 = scalar_select %p33, 0, %s32
      %s35 = sadd.s32 1, %s26
      %s36 = scalar_select %p33, %s35, %s26
      %p37 = scmp.ge.s32.totalorder %s36, 2
      %s38 = scalar_select %p37, 0, %s36
      %s39 = ssub.s32 %s26, %s38
      %s40 = ssub.s32 %s27, %s34
      %s41 = sor.u32 %s39, %s40
      %p42 = scmp.eq.s32.totalorder %s41, 0
      %s44 = sadd.s32 %s43, 1
      %s45 = scalar_select %p42, %s43, %s44
      %p48 = pneg %p42
      %p49 = scmp.eq.s32.totalorder %s19, 3
      %p50 = por %p48, %p49
      %p51 = scmp.ne.s32.totalorder %s43, %s46
      %p52 = scmp.eq.s32.totalorder %s19, 0
      %p53 = por %p51, %p52
      %p54 = scmp.ne.s32.totalorder %s43, %s46
      %p55 = scmp.eq.s32.totalorder %s24, 3
      %p56 = por %p54, %p55
      %p57 = scmp.ne.s32.totalorder %s46, %s47
      %p58 = scmp.eq.s32.totalorder %s24, 0
      %p59 = por %p57, %p58
      %p60 = scmp.ne.s32.totalorder %s46, %s47
      %p61 = scmp.eq.s32.totalorder %s25, 3
      %p62 = por %p60, %p61
      %p64 = scmp.ne.s32.totalorder %s47, %s63
      %p65 = scmp.eq.s32.totalorder %s25, 0
      %p66 = por %p64, %p65
      %s68 = sadd.s32 %s67, 1
      %p71 = scmp.eq.s32.totalorder %s19, 3
      %p72 = scmp.ne.s32.totalorder %s67, %s69
      %p73 = scmp.eq.s32.totalorder %s19, 0
      %p74 = por %p72, %p73
      %p75 = scmp.ne.s32.totalorder %s67, %s69
      %p76 = scmp.eq.s32.totalorder %s24, 3
      %p77 = por %p75, %p76
      %p78 = scmp.ne.s32.totalorder %s69, %s70
      %p79 = scmp.eq.s32.totalorder %s24, 0
      %p80 = por %p78, %p79
      %p81 = scmp.ne.s32.totalorder %s69, %s70
      %p82 = scmp.eq.s32.totalorder %s25, 3
      %p83 = por %p81, %p82
      %p85 = scmp.ne.s32.totalorder %s70, %s84
      %p86 = scmp.eq.s32.totalorder %s25, 0
      %p87 = por %p85, %p86
      %s89 = sadd.s32 %s88, 1
      %p92 = scmp.eq.s32.totalorder %s19, 3
      %p93 = scmp.ne.s32.totalorder %s88, %s90
      %p94 = scmp.eq.s32.totalorder %s19, 0
      %p95 = por %p93, %p94
      %p96 = scmp.ne.s32.totalorder %s88, %s90
      %p97 = scmp.eq.s32.totalorder %s24, 3
      %p98 = por %p96, %p97
      %p99 = scmp.ne.s32.totalorder %s90, %s91
      %p100 = scmp.eq.s32.totalorder %s24, 0
      %p101 = por %p99, %p100
      %p102 = scmp.ne.s32.totalorder %s90, %s91
      %p103 = scmp.eq.s32.totalorder %s25, 3
      %p104 = por %p102, %p103
      %p106 = scmp.ne.s32.totalorder %s91, %s105
      %p107 = scmp.eq.s32.totalorder %s25, 0
      %p108 = por %p106, %p107
      %s110 = sadd.s32 %s109, 1
      %p113 = scmp.eq.s32.totalorder %s19, 3
      %p114 = scmp.ne.s32.totalorder %s109, %s111
      %p115 = scmp.eq.s32.totalorder %s19, 0
      %p116 = por %p114, %p115
      %p117 = scmp.ne.s32.totalorder %s109, %s111
      %p118 = scmp.eq.s32.totalorder %s24, 3
      %p119 = por %p117, %p118
      %p120 = scmp.ne.s32.totalorder %s111, %s112
      %p121 = scmp.eq.s32.totalorder %s24, 0
      %p122 = por %p120, %p121
      %p123 = scmp.ne.s32.totalorder %s111, %s112
      %p124 = scmp.eq.s32.totalorder %s25, 3
      %p125 = por %p123, %p124
      %p127 = scmp.ne.s32.totalorder %s112, %s126
      %p128 = scmp.eq.s32.totalorder %s25, 0
      %p129 = por %p127, %p128
      %s131 = sadd.s32 %s130, 1
      %p134 = scmp.eq.s32.totalorder %s19, 3
      %p135 = scmp.ne.s32.totalorder %s130, %s132
      %p136 = scmp.eq.s32.totalorder %s19, 0
      %p137 = por %p135, %p136
      %p138 = scmp.ne.s32.totalorder %s130, %s132
      %p139 = scmp.eq.s32.totalorder %s24, 3
      %p140 = por %p138, %p139
      %p141 = scmp.ne.s32.totalorder %s132, %s133
      %p142 = scmp.eq.s32.totalorder %s24, 0
      %p143 = por %p141, %p142
      %p144 = scmp.ne.s32.totalorder %s132, %s133
      %p145 = scmp.eq.s32.totalorder %s25, 3
      %p146 = por %p144, %p145
      %p148 = scmp.ne.s32.totalorder %s133, %s147
      %p149 = scmp.eq.s32.totalorder %s25, 0
      %p150 = por %p148, %p149
      %s151 = ssub.s32 %s26, %s38
      %p152 = scmp.eq.s32.totalorder %s151, 0
      %s154 = sadd.s32 %s153, 1
      %s155 = scalar_select %p152, %s153, %s154
      %p158 = pneg %p152
      %p159 = scmp.eq.s32.totalorder %s19, 3
      %p160 = por %p158, %p159
      %p161 = scmp.ne.s32.totalorder %s153, %s156
      %p162 = scmp.eq.s32.totalorder %s19, 0
      %p163 = por %p161, %p162
      %p164 = scmp.ne.s32.totalorder %s153, %s156
      %p165 = scmp.eq.s32.totalorder %s24, 3
      %p166 = por %p164, %p165
      %p167 = scmp.ne.s32.totalorder %s156, %s157
      %p168 = scmp.eq.s32.totalorder %s24, 0
      %p169 = por %p167, %p168
      %p170 = scmp.ne.s32.totalorder %s156, %s157
      %p171 = scmp.eq.s32.totalorder %s25, 3
      %p172 = por %p170, %p171
      %p174 = scmp.ne.s32.totalorder %s157, %s173
      %p175 = scmp.eq.s32.totalorder %s25, 0
      %p176 = por %p174, %p175
      %s177 = ssub.s32 %s26, %s38
      %p178 = scmp.eq.s32.totalorder %s177, 0
      %s180 = sadd.s32 %s179, 1
      %s181 = scalar_select %p178, %s179, %s180
      %p184 = pneg %p178
      %p185 = scmp.eq.s32.totalorder %s19, 3
      %p186 = por %p184, %p185
      %p187 = scmp.ne.s32.totalorder %s179, %s182
      %p188 = scmp.eq.s32.totalorder %s19, 0
      %p189 = por %p187, %p188
      %p190 = scmp.ne.s32.totalorder %s179, %s182
      %p191 = scmp.eq.s32.totalorder %s24, 3
      %p192 = por %p190, %p191
      %p193 = scmp.ne.s32.totalorder %s182, %s183
      %p194 = scmp.eq.s32.totalorder %s24, 0
      %p195 = por %p193, %p194
      %p196 = scmp.ne.s32.totalorder %s182, %s183
      %p197 = scmp.eq.s32.totalorder %s25, 3
      %p198 = por %p196, %p197
      %p200 = scmp.ne.s32.totalorder %s183, %s199
      %p201 = scmp.eq.s32.totalorder %s25, 0
      %p202 = por %p200, %p201
      %p203 = scmp.le.s32.totalorder 1, %s19
      %p204 = scmp.lt.s32.totalorder %s19, 5
      %p205 = pnand %p203, %p204
      %p206 = pneg %p205
      // Predicated region
      $region9: #{tpu_custom_call.1} parent=5 // pred_check
        _
      $region10: #{tpu_custom_call.1} parent=5 // pred_check_branch
        %208 = sbr.rel (%p205) target = $region12
      $region11: #{tpu_custom_call.1} parent=5 // pred_region
        %s209 = ssub.s32 %s19, 1
        // Predicated region
        $region13: #{tpu_custom_call.1} parent=11 // pred_check
          %p210 = pneg %p80
        $region14: #{tpu_custom_call.1} parent=11 // pred_check_branch
          %212 = sbr.rel (%p210) target = $region16
        $region15: #{tpu_custom_call.1} parent=11 // pred_region
          _
        $region16: #{tpu_custom_call.1} parent=11 // pred_fallthru
          _
        // Predicated region
        $region17: #{tpu_custom_call.1} parent=11 // pred_check
          %p213 = pneg %p101
        $region18: #{tpu_custom_call.1} parent=11 // pred_check_branch
          %215 = sbr.rel (%p213) target = $region20
        $region19: #{tpu_custom_call.1} parent=11 // pred_region
          _
        $region20: #{tpu_custom_call.1} parent=11 // pred_fallthru
          _
        // Predicated region
        $region21: #{tpu_custom_call.1} parent=11 // pred_check
          %p216 = pneg %p122
        $region22: #{tpu_custom_call.1} parent=11 // pred_check_branch
          %218 = sbr.rel (%p216) target = $region24
        $region23: #{tpu_custom_call.1} parent=11 // pred_region
          _
        $region24: #{tpu_custom_call.1} parent=11 // pred_fallthru
          _
        // Predicated region
        $region25: #{tpu_custom_call.1} parent=11 // pred_check
          %p219 = pneg %p143
        $region26: #{tpu_custom_call.1} parent=11 // pred_check_branch
          %221 = sbr.rel (%p219) target = $region28
        $region27: #{tpu_custom_call.1} parent=11 // pred_region
          _
        $region28: #{tpu_custom_call.1} parent=11 // pred_fallthru
          _
      $region12: #{tpu_custom_call.1} parent=5 // pred_fallthru
        _
      %p222 = scmp.lt.s32.totalorder %s19, 4
      // Predicated region
      $region29: #{tpu_custom_call.1} parent=5 // pred_check
        %p223 = pneg %p222
      $region30: #{tpu_custom_call.1} parent=5 // pred_check_branch
        %225 = sbr.rel (%p223) target = $region32
      $region31: #{tpu_custom_call.1} parent=5 // pred_region
        // Predicated region
        $region33: #{tpu_custom_call.1} parent=31 // pred_check
          %p226 = pneg %p53
        $region34: #{tpu_custom_call.1} parent=31 // pred_check_branch
          %228 = sbr.rel (%p226) target = $region36
        $region35: #{tpu_custom_call.1} parent=31 // pred_region
          %s229 = smul.u32 4, %s27
          %p230 = scmp.lt.s32.totalorder %s26, 1
          %s231 = scalar_select %p230, %s26, 1
          %p232 = scmp.lt.s32.totalorder %s229, 7
          %s233 = scalar_select %p232, %s229, 7
          %s234 = smul.addr %s231, 8
          %s235 = sadd.s32 %s233, %s234
          %s236 = smul.addr %s235, 4
          %s237 = scalar_lea.vmem %s0, %s236
          %s238 = smul.u32 4, %s27
        $region36: #{tpu_custom_call.1} parent=31 // pred_fallthru
          _
      $region32: #{tpu_custom_call.1} parent=5 // pred_fallthru
        _
      %p239 = scmp.le.s32.totalorder 1, %s19
      %p240 = scmp.lt.s32.totalorder %s19, 5
      %p241 = pnand %p239, %p240
      %p242 = pneg %p241
      // Predicated region
      $region37: #{tpu_custom_call.1} parent=5 // pred_check
        _
      $region38: #{tpu_custom_call.1} parent=5 // pred_check_branch
        %244 = sbr.rel (%p241) target = $region40
      $region39: #{tpu_custom_call.1} parent=5 // pred_region
        %s245 = ssub.s32 %s19, 1
        %s246 = smul.u32 4, %s29
        %p247 = scmp.lt.s32.totalorder %s28, 1
        %s248 = scalar_select %p247, %s28, 1
        %p249 = scmp.lt.s32.totalorder %s246, 7
        %s250 = scalar_select %p249, %s246, 7
        %s251 = smul.addr %s248, 8
        %s252 = sadd.s32 %s250, %s251
        %s253 = smul.addr %s252, 4
        %s254 = scalar_lea.vmem %s0, %s253
        %p255 = pneg %p59
        %p256 = pneg %p56
        %p257 = pneg %p80
        %p258 = pneg %p77
        %p259 = pneg %p101
        %p260 = pneg %p98
        %p261 = pneg %p122
        %p262 = pneg %p119
        %p263 = pneg %p143
        %p264 = pneg %p140
        %p265 = pneg %p169
        %p266 = pneg %p166
        %s267 = sand.u32 %s156, 1
        %s268 = scalar_lea.sflag [#allocation5], %s267
        %s269 = sand.u32 %s156, 1
        %s270 = scalar_lea.vmem [#allocation4], %s269
        %p271 = pneg %p195
        %p272 = pneg %p192
        %s273 = sand.u32 %s182, 1
        %s274 = scalar_lea.sflag [#allocation7], %s273
        %s275 = sand.u32 %s182, 1
        %s276 = scalar_lea.vmem [#allocation6], %s275
        %s277 = smul.u32 4, %s29
        %p278 = scmp.lt.s32.totalorder %s28, 1
        %s279 = scalar_select %p278, %s28, 1
        %p280 = scmp.lt.s32.totalorder %s277, 7
        %s281 = scalar_select %p280, %s277, 7
        %s282 = smul.addr %s279, 8
        %s283 = sadd.s32 %s281, %s282
        %s284 = smul.addr %s283, 4
        %s285 = scalar_lea.vmem %s0, %s284
        %s286 = smul.u32 4, %s29
        %p287 = scmp.eq.s32.totalorder %s29, 0
        // Predicated region
        $region41: #{tpu_custom_call.1} parent=39 // pred_check
          %p288 = pneg %p287
        $region42: #{tpu_custom_call.1} parent=39 // pred_check_branch
          %290 = sbr.rel (%p288) target = $region44
        $region43: #{tpu_custom_call.1} parent=39 // pred_region
          %vm291 = vcmask 57344
          %292 = vst.msk [vmem:[#allocation2] sm:$0x1] %vm291, 0.0
          %293 = vst.msk [vmem:[#allocation3] sm:$0x1] %vm291, 0.0
        $region44: #{tpu_custom_call.1} parent=39 // pred_fallthru
          _
        %v294 = vld [vmem:[%s285] sm:$0xf]
        %v295 = vld [vmem:[%s285 + $0x4] sm:$0xf]
        %v296 = vld [vmem:[%s285 + $0x8] sm:$0xf]
        %v297 = vld [vmem:[%s285 + $0xc] sm:$0xf]
        %v298 = vunpack.c.l.bf16 %v294
        %v299 = vunpack.c.l.bf16 %v295
        %v300 = vunpack.c.l.bf16 %v296
        %v301 = vunpack.c.l.bf16 %v297
        %v302 = vld [vmem:[#allocation2] sm:$0x1]
        %vm303 = vcmask 64512
        %v304 = vsel %vm303, %v298, 0.0
        %v305 = vsel %vm303, %v299, 0.0
        %v306 = vadd.f32 %v304, %v305
        %v307 = vsel %vm303, %v300, 0.0
        %v308 = vadd.f32 %v306, %v307
        %v309 = vsel %vm303, %v301, 0.0
        %v310 = vadd.f32 %v308, %v309
        %v311 = vrot.slane %v310, 4
        %v312 = vadd.f32 %v310, %v311
        %v313 = vrot.slane %v312, 2
        %v314 = vadd.f32 %v312, %v313
        %v315 = vrot.slane %v314, 1
        %v316 = vadd.f32 %v314, %v315
        %v317 = vadd.f32 %v302, %v316
        %vm318 = vcmask 57344
        %319 = vst.msk [vmem:[#allocation2] sm:$0x1] %vm318, %v317
        %v320 = vld [vmem:[#allocation3] sm:$0x1]
        %v321 = vmul.f32 %v298, %v298
        %v322 = vmul.f32 %v299, %v299
        %v323 = vmul.f32 %v300, %v300
        %v324 = vmul.f32 %v301, %v301
        %v325 = vsel %vm303, %v321, 0.0
        %v326 = vsel %vm303, %v322, 0.0
        %v327 = vadd.f32 %v325, %v326
        %v328 = vsel %vm303, %v323, 0.0
        %v329 = vadd.f32 %v327, %v328
        %v330 = vsel %vm303, %v324, 0.0
        %v331 = vadd.f32 %v329, %v330
        %v332 = vrot.slane %v331, 4
        %v333 = vadd.f32 %v331, %v332
        %v334 = vrot.slane %v333, 2
        %v335 = vadd.f32 %v333, %v334
        %v336 = vrot.slane %v335, 1
        %v337 = vadd.f32 %v335, %v336
        %v338 = vadd.f32 %v320, %v337
        %339 = vst.msk [vmem:[#allocation3] sm:$0x1] %vm318, %v338
        %p340 = scmp.eq.s32.totalorder %s29, 1
        // Predicated region
        $region45: #{tpu_custom_call.1} parent=39 // pred_check
          %p341 = pneg %p340
        $region46: #{tpu_custom_call.1} parent=39 // pred_check_branch
          %343 = sbr.rel (%p341) target = $region48
        $region47: #{tpu_custom_call.1} parent=39 // pred_region
          %v344 = vld [vmem:[%s3] sm:$0xff]
          %v345 = vld [vmem:[%s4] sm:$0xf]
          %v346 = vld [vmem:[#allocation2] sm:$0x1]
          %v348 = vsel %vm303, %v346, 0
          %350 = vmatpush.msra.mxu0 0.0
          %351 = vmatpush.msra.mxu0 0.0
          %352 = vmatpush.msra.mxu0 0.0
          %353 = vmatpush.msra.mxu0 0.0
          %354 = vmatpush.msra.mxu0 0.0
          %355 = vmatpush.msra.mxu0 0.0
          %356 = vmatpush.msra.mxu0 0.0
          %357 = vmatpush.msra.mxu0 0.0
          %358 = vmatpush.msra.mxu0 0.0
          %359 = vmatpush.msra.mxu0 0.0
          %360 = vmatpush.msra.mxu0 0.0
          %361 = vmatpush.msra.mxu0 0.0
          %362 = vmatpush.msra.mxu0 0.0
          %363 = vmatpush.msra.mxu0 0.0
          %364 = vmatpush.msra.mxu0 0.0
          %365 = vmatpush.msra.mxu0 %v344
          %366 = vmatmul.f32.gmra.mxu0 %v348
          %v367 = vpop.f32.mrf.mxu0
          %v368 = vadd.f32 0.0, %v367
          %369 = vdwg.mxu0
          %v370 = vld [vmem:[#allocation3] sm:$0x1]
          %v372 = vsel %vm303, %v370, 0
          %374 = vmatpush.msra.mxu0 0.0
          %375 = vmatpush.msra.mxu0 0.0
          %376 = vmatpush.msra.mxu0 0.0
          %377 = vmatpush.msra.mxu0 0.0
          %378 = vmatpush.msra.mxu0 0.0
          %379 = vmatpush.msra.mxu0 0.0
          %380 = vmatpush.msra.mxu0 0.0
          %381 = vmatpush.msra.mxu0 0.0
          %382 = vmatpush.msra.mxu0 0.0
          %383 = vmatpush.msra.mxu0 0.0
          %384 = vmatpush.msra.mxu0 0.0
          %385 = vmatpush.msra.mxu0 0.0
          %386 = vmatpush.msra.mxu0 0.0
          %387 = vmatpush.msra.mxu0 0.0
          %388 = vmatpush.msra.mxu0 0.0
          %389 = vmatpush.msra.mxu0 %v344
          %390 = vmatmul.f32.gmra.mxu0 %v372
          %v391 = vpop.f32.mrf.mxu0
          %v392 = vadd.f32 0.0, %v391
          %393 = vdwg.mxu0
          %v394 = vmul.f32 %v368, 0.0078125
          %v395 = vmul.f32 %v392, 0.0078125
          %v396 = vmul.f32 %v394, %v394
          %v397 = vsub.f32 %v395, %v396
          %v398 = vmax.f32 %v397, 0.0
          %vm399 = vcmask 31744
          %v401 = vsel %vm399, %v394, 0
          %vm403 = vcmask 1043456
          %v405 = vsel %vm403, %v345, 0
          %407 = vmatpush.msra.mxu0 0.0
          %408 = vmatpush.msra.mxu0 0.0
          %409 = vmatpush.msra.mxu0 0.0
          %410 = vmatpush.msra.mxu0 0.0
          %411 = vmatpush.msra.mxu0 0.0
          %412 = vmatpush.msra.mxu0 0.0
          %413 = vmatpush.msra.mxu0 0.0
          %414 = vmatpush.msra.mxu0 0.0
          %415 = vmatpush.msra.mxu0 0.0
          %416 = vmatpush.msra.mxu0 0.0
          %417 = vmatpush.msra.mxu0 0.0
          %418 = vmatpush.msra.mxu0 0.0
          %419 = vmatpush.msra.mxu0 0.0
          %420 = vmatpush.msra.mxu0 0.0
          %421 = vmatpush.msra.mxu0 0.0
          %422 = vmatpush.msra.mxu0 %v405
          %423 = vmatmul.f32.gmra.mxu0 %v401
          %v424 = vpop.f32.mrf.mxu0
          %v425 = vadd.f32 0.0, %v424
          %426 = vdwg.mxu0
          %v428 = vsel %vm399, %v398, 0
          %430 = vmatpush.msra.mxu0 0.0
          %431 = vmatpush.msra.mxu0 0.0
          %432 = vmatpush.msra.mxu0 0.0
          %433 = vmatpush.msra.mxu0 0.0
          %434 = vmatpush.msra.mxu0 0.0
          %435 = vmatpush.msra.mxu0 0.0
          %436 = vmatpush.msra.mxu0 0.0
          %437 = vmatpush.msra.mxu0 0.0
          %438 = vmatpush.msra.mxu0 0.0
          %439 = vmatpush.msra.mxu0 0.0
          %440 = vmatpush.msra.mxu0 0.0
          %441 = vmatpush.msra.mxu0 0.0
          %442 = vmatpush.msra.mxu0 0.0
          %443 = vmatpush.msra.mxu0 0.0
          %444 = vmatpush.msra.mxu0 0.0
          %445 = vmatpush.msra.mxu0 %v405
          %446 = vmatmul.f32.gmra.mxu0 %v428
          %v447 = vpop.f32.mrf.mxu0
          %v448 = vadd.f32 1e-05, %v447
          %449 = vdwg.mxu0
          %v450 = vrsqrt.pop %v448
          %v451 = vmul.f32 %v450, %v448
          %v452 = vmul.f32 %v451, %v450
          %v453 = vmul.f32 0.5, %v452
          %v454 = vsub.f32 1.5, %v453
          %v455 = vmul.f32 %v450, %v454
          %vm456 = vweird.f32 %v448
          %vm457 = vweird.f32 %v450
          %vm458 = vmor %vm456, %vm457
          %v459 = vsel %vm458, %v450, %v455
          %v460 = vld [vmem:[%s1] sm:$0x1]
          %v461 = vmul.f32 %v459, %v460
          %462 = vst.msk [vmem:[%s270] sm:$0x1] %vm318, %v461
          %v463 = vld [vmem:[%s2] sm:$0x1]
          %v464 = vmul.f32 %v425, %v461
          %v465 = vsub.f32 %v463, %v464
          %466 = vst.msk [vmem:[%s276] sm:$0x1] %vm318, %v465
        $region48: #{tpu_custom_call.1} parent=39 // pred_fallthru
          _
        %s467 = sand.u32 %s156, 1
        %s468 = scalar_lea.sflag [#allocation5], %s467
        %s469 = sand.u32 %s156, 1
        %s470 = scalar_lea.vmem [#allocation4], %s469
        %s471 = sand.u32 %s182, 1
        %s472 = scalar_lea.sflag [#allocation7], %s471
        %s473 = sand.u32 %s182, 1
        %s474 = scalar_lea.vmem [#allocation6], %s473
        // Predicated region
        $region49: #{tpu_custom_call.1} parent=39 // pred_check
          %p475 = pneg %p166
        $region50: #{tpu_custom_call.1} parent=39 // pred_check_branch
          %477 = sbr.rel (%p475) target = $region52
        $region51: #{tpu_custom_call.1} parent=39 // pred_region
          %479 = vsyncadd %s468, 0
          %s480 = scalar_lea.hbm %s5, %s28
          %s482 = sshll.u32 %s470, 4
          %s483 = int_to_ptr.vmem [resolvable:$true] %s482
          %s484 = sshll.u32 %s480, 4
          %s485 = int_to_ptr.hbm [resolvable:$true] %s484
          %487 = dma.vmem_to_hbm [thread:$0]  %s483, 16, %s485, %s468
        $region52: #{tpu_custom_call.1} parent=39 // pred_fallthru
          _
        // Predicated region
        $region53: #{tpu_custom_call.1} parent=39 // pred_check
          %p488 = pneg %p192
        $region54: #{tpu_custom_call.1} parent=39 // pred_check_branch
          %490 = sbr.rel (%p488) target = $region56
        $region55: #{tpu_custom_call.1} parent=39 // pred_region
          %492 = vsyncadd %s472, 0
          %s493 = scalar_lea.hbm %s6, %s28
          %s495 = sshll.u32 %s474, 4
          %s496 = int_to_ptr.vmem [resolvable:$true] %s495
          %s497 = sshll.u32 %s493, 4
          %s498 = int_to_ptr.hbm [resolvable:$true] %s497
          %500 = dma.vmem_to_hbm [thread:$0]  %s496, 16, %s498, %s472
        $region56: #{tpu_custom_call.1} parent=39 // pred_fallthru
          _
      $region40: #{tpu_custom_call.1} parent=5 // pred_fallthru
        _
      %p501 = scmp.le.s32.totalorder 2, %s19
      // Predicated region
      $region57: #{tpu_custom_call.1} parent=5 // pred_check
        %p502 = pneg %p501
      $region58: #{tpu_custom_call.1} parent=5 // pred_check_branch
        %504 = sbr.rel (%p502) target = $region60
      $region59: #{tpu_custom_call.1} parent=5 // pred_region
        %s505 = ssub.s32 %s19, 2
        // Predicated region
        $region61: #{tpu_custom_call.1} parent=59 // pred_check
          %p506 = pneg %p172
        $region62: #{tpu_custom_call.1} parent=59 // pred_check_branch
          %508 = sbr.rel (%p506) target = $region64
        $region63: #{tpu_custom_call.1} parent=59 // pred_region
          %s509 = sand.u32 %s157, 1
          %s510 = scalar_lea.sflag [#allocation5], %s509
          %s511 = sand.u32 %s157, 1
          %s512 = scalar_lea.vmem [#allocation4], %s511
          %514 = dma.done %s510, 16
        $region64: #{tpu_custom_call.1} parent=59 // pred_fallthru
          _
        // Predicated region
        $region65: #{tpu_custom_call.1} parent=59 // pred_check
          %p515 = pneg %p198
        $region66: #{tpu_custom_call.1} parent=59 // pred_check_branch
          %517 = sbr.rel (%p515) target = $region68
        $region67: #{tpu_custom_call.1} parent=59 // pred_region
          %s518 = sand.u32 %s183, 1
          %s519 = scalar_lea.sflag [#allocation7], %s518
          %s520 = sand.u32 %s183, 1
          %s521 = scalar_lea.vmem [#allocation6], %s520
          %523 = dma.done %s519, 16
        $region68: #{tpu_custom_call.1} parent=59 // pred_fallthru
          _
      $region60: #{tpu_custom_call.1} parent=5 // pred_fallthru
        _
    $region6: #{tpu_custom_call.1} parent=1 // loop_footer
      %s23 = sadd.s32 1, %s19
    $region7: #{tpu_custom_call.1} parent=1 // loop_footer_branch
      %18 = sbr.rel target = $region3
    $region8: #{tpu_custom_call.1} parent=1 // loop_exit
      _
    %524 = vsyncpa [#allocation5], 1
    %s525 = scalar_lea.sflag [#allocation5], 1
    %526 = vsyncpa %s525, 1
    %527 = vsyncpa [#allocation7], 1
    %s528 = scalar_lea.sflag [#allocation7], 1
    %529 = vsyncpa %s528, 1

</llo_original>
